<compile_context>
chip_gen: v7x
topology: tpu7x:2x2x1
jax: 0.10.0
libtpu: 0.0.40
codegen_flags: <defaults>
</compile_context>

<pallas_src>
import functools

import jax
import jax.numpy as jnp
import numpy as np
from jax.experimental import pallas as pl
from jax.experimental.pallas import tpu as pltpu


def kimcnn_kernel(x_ref, wconv_ref, bconv_ref, mask_ref, wfc_ref, bfc_ref,
                  out_ref, *, kmax, lout_pad):
    """Fused im2col conv -> bias -> ReLU -> masked max-pool -> FC -> sigmoid.

    x_ref:     [TB, l_pad, D]        l_pad = lout_pad + kmax - 1 (zero tail)
    wconv_ref: [kmax*D, n_br*Co]     window axis zero-padded, branches stacked
    bconv_ref: [1, n_br*Co]          f32
    mask_ref:  [lout_pad, n_br*Co]   1.0 at valid conv positions, else 0.0
    wfc_ref:   [n_br*Co, C]
    bfc_ref:   [1, C]                f32
    out_ref:   [TB, C]               f32
    """
    x = x_ref[...]                                       # [TB, l_pad, D]
    tb = x.shape[0]

    # im2col along the lane axis: [TB, lout_pad, kmax*D].
    xcat = jnp.concatenate([x[:, k:k + lout_pad, :] for k in range(kmax)],
                           axis=-1)
    kd = xcat.shape[-1]

    # Flatten (TB, lout_pad) -> TB*lout_pad (lout_pad is a multiple of 8 so
    # this is a layout-free view) and run ONE 2-D MXU matmul for all branches.
    xflat = xcat.reshape(tb * lout_pad, kd)
    conv = jnp.dot(xflat, wconv_ref[...],
                   preferred_element_type=jnp.float32)   # [TB*lout_pad, nCo]
    conv = conv.reshape(tb, lout_pad, conv.shape[-1])    # [TB, lout_pad, nCo]

    # relu(conv + bias); zero-padded weight rows contribute 0, so shorter-K
    # branches are exact at every valid position.  Mask out positions the
    # reference never computes, then global max-pool over time.
    h = jnp.maximum(conv + bconv_ref[...][None, :, :], 0.0)
    h = h * mask_ref[...][None, :, :]
    pooled = jnp.max(h, axis=1)                          # [TB, nCo] f32

    # TODO(synk): dropout is identity at inference (eval mode); training-mode
    # stochastic masking is not implemented here.

    logits = jnp.dot(pooled.astype(wfc_ref.dtype), wfc_ref[...],
                     preferred_element_type=jnp.float32) + bfc_ref[...]
    out_ref[...] = jax.nn.sigmoid(logits).astype(out_ref.dtype)


def kimcnn_forward(x, params, ksizes, *, compute_dtype=jnp.float32,
                   block_b=256):
    """x: [B, L, D] float32.  params: w{K} [K,D,Co], b{K} [1,Co], wfc, bfc."""
    B, L, D = x.shape
    Ks = tuple(ksizes)
    kmax = max(Ks)
    assert L >= kmax, f"sequence length {L} < largest kernel size {kmax}"
    Co = params[f"b{Ks[0]}"].shape[-1]
    C = params["bfc"].shape[-1]
    n_ch = len(Ks) * Co

    lout = L - min(Ks) + 1                 # most conv positions over branches
    lout_pad = -(-lout // 8) * 8           # sublane-align the time axis
    l_pad = lout_pad + kmax - 1            # rows touched by im2col windows

    # ---- One-time layout plumbing in the wrapper (plain XLA) ----------------
    w_cols, b_cols, m_cols = [], [], []
    for K in Ks:
        w = params[f"w{K}"]                                 # [K, D, Co]
        w = jnp.pad(w, ((0, kmax - K), (0, 0), (0, 0)))     # [kmax, D, Co]
        w_cols.append(w.reshape(kmax * D, Co))
        b_cols.append(params[f"b{K}"].reshape(1, Co))
        valid = (jnp.arange(lout_pad) < (L - K + 1)).astype(jnp.float32)
        m_cols.append(jnp.broadcast_to(valid[:, None], (lout_pad, Co)))
    # MXU operands may be bf16; bias / mask / all elementwise math stay f32.
    wconv = jnp.concatenate(w_cols, axis=1).astype(compute_dtype)
    bconv = jnp.concatenate(b_cols, axis=1).astype(jnp.float32)
    mask = jnp.concatenate(m_cols, axis=1).astype(jnp.float32)
    wfc = params["wfc"].astype(compute_dtype)
    bfc = params["bfc"].astype(jnp.float32)

    x_pad = jnp.pad(x, ((0, 0), (0, l_pad - L), (0, 0))).astype(compute_dtype)

    # ---- Batch-tiled grid ----------------------------------------------------
    # TODO(synk): if n_br*Co grows past 128 (e.g. Co=100 -> 300), pad each
    # branch's channel block to a multiple of 128 for unmasked lane-dense stores.
    TB = min(block_b, B)
    B_pad = -(-B // TB) * TB
    if B_pad != B:
        x_pad = jnp.pad(x_pad, ((0, B_pad - B), (0, 0), (0, 0)))
    grid = (B_pad // TB,)

    kernel = functools.partial(kimcnn_kernel, kmax=kmax, lout_pad=lout_pad)
    out = pl.pallas_call(
        kernel,
        out_shape=jax.ShapeDtypeStruct((B_pad, C), jnp.float32),
        grid_spec=pltpu.PrefetchScalarGridSpec(
            num_scalar_prefetch=0,
            grid=grid,
            in_specs=[
                pl.BlockSpec((TB, l_pad, D), lambda i: (i, 0, 0)),      # x
                pl.BlockSpec((kmax * D, n_ch), lambda i: (0, 0)),       # wconv
                pl.BlockSpec((1, n_ch), lambda i: (0, 0)),              # bconv
                pl.BlockSpec((lout_pad, n_ch), lambda i: (0, 0)),       # mask
                pl.BlockSpec((n_ch, C), lambda i: (0, 0)),              # wfc
                pl.BlockSpec((1, C), lambda i: (0, 0)),                 # bfc
            ],
            out_specs=pl.BlockSpec((TB, C), lambda i: (i, 0)),
        ),
        compiler_params=pltpu.CompilerParams(
            dimension_semantics=("parallel",),
            vmem_limit_bytes=64 << 20,
        ),
    )(x_pad, wconv, bconv, mask, wfc, bfc)
    return out[:B]


def kimcnn_reference(x, params, ksizes):
    """Pure-JAX reference mirroring the PyTorch forward semantics (f32)."""
    B, L, D = x.shape
    feats = []
    for K in ksizes:
        w, b = params[f"w{K}"], params[f"b{K}"]
        Lout = L - K + 1
        acc = jnp.zeros((B, Lout, w.shape[-1]), jnp.float32)
        for k in range(K):
            acc = acc + jnp.einsum("bld,dc->blc", x[:, k:k + Lout, :], w[k])
        acc = jax.nn.relu(acc + b.reshape(1, 1, -1))
        feats.append(jnp.max(acc, axis=1))
    feat = jnp.concatenate(feats, axis=1)
    return jax.nn.sigmoid(feat @ params["wfc"] + params["bfc"])


if __name__ == "__main__":
    # Small shapes consistent with the module:
    #   embed_dim D=32, seq len L=16, kernel_num Co=8, kernel_sizes Ks=(3,4,5),
    #   class_num C=4, batch B=2.  (embed_num is unused by forward.)
    B, L, D = 2, 16, 32
    Co, C = 8, 4
    Ks = (3, 4, 5)

    key = jax.random.PRNGKey(0)
    keys = jax.random.split(key, 9)

    x = jax.random.normal(keys[0], (B, L, D), jnp.float32)
    params = {
        # Conv2d(1, Co, (K, D)) weight stored as [K, D, Co] (bias as [1, Co]).
        "w3": 0.1 * jax.random.normal(keys[1], (3, D, Co), jnp.float32),
        "b3": 0.1 * jax.random.normal(keys[2], (1, Co), jnp.float32),
        "w4": 0.1 * jax.random.normal(keys[3], (4, D, Co), jnp.float32),
        "b4": 0.1 * jax.random.normal(keys[4], (1, Co), jnp.float32),
        "w5": 0.1 * jax.random.normal(keys[5], (5, D, Co), jnp.float32),
        "b5": 0.1 * jax.random.normal(keys[6], (1, Co), jnp.float32),
        # fc1: Linear(len(Ks)*Co, C) stored as [len(Ks)*Co, C] (bias [1, C]).
        "wfc": 0.1 * jax.random.normal(keys[7], (len(Ks) * Co, C), jnp.float32),
        "bfc": 0.1 * jax.random.normal(keys[8], (1, C), jnp.float32),
    }

    ref = jax.block_until_ready(kimcnn_reference(x, params, Ks))

    # f32 path: bit-accurate-ish vs the f32 reference.
    out_f32 = jax.block_until_ready(kimcnn_forward(x, params, Ks))
    assert out_f32.shape == (B, C), out_f32.shape
    np.testing.assert_allclose(np.asarray(out_f32), np.asarray(ref),
                               atol=1e-5, rtol=1e-5)

    # bf16 operand path (f32 accumulation / elementwise): loosened tolerance.
    out_bf16 = jax.block_until_ready(
        kimcnn_forward(x, params, Ks, compute_dtype=jnp.bfloat16))
    np.testing.assert_allclose(np.asarray(out_bf16), np.asarray(ref),
                               atol=3e-2, rtol=3e-2)

    print("KERNEL_OK")
</pallas_src>

<mosaic_0001>
module attributes {stable_mosaic.version = 11 : i64} {
  func.func @kimcnn_kernel(%arg0: i32, %arg1: memref<2x20x32xf32, #tpu.memory_space<vmem>>, %arg2: memref<160x24xf32, #tpu.memory_space<vmem>>, %arg3: memref<1x24xf32, #tpu.memory_space<vmem>>, %arg4: memref<16x24xf32, #tpu.memory_space<vmem>>, %arg5: memref<24x4xf32, #tpu.memory_space<vmem>>, %arg6: memref<1x4xf32, #tpu.memory_space<vmem>>, %arg7: memref<2x4xf32, #tpu.memory_space<vmem>>) attributes {dimension_semantics = [#tpu.dimension_semantics<parallel>], iteration_bounds = array<i64: 1>, scalar_prefetch = 0 : i64, scratch_operands = 0 : i64, tpu.core_type = #tpu.core_type<tc>, window_params = [{transform_indices = @transform_0, window_bounds = array<i64: 2, 20, 32>}, {pipeline_mode = #tpu.pipeline_mode<synchronous>, transform_indices = @transform_1, window_bounds = array<i64: 160, 24>}, {pipeline_mode = #tpu.pipeline_mode<synchronous>, transform_indices = @transform_2, window_bounds = array<i64: 1, 24>}, {pipeline_mode = #tpu.pipeline_mode<synchronous>, transform_indices = @transform_3, window_bounds = array<i64: 16, 24>}, {pipeline_mode = #tpu.pipeline_mode<synchronous>, transform_indices = @transform_4, window_bounds = array<i64: 24, 4>}, {pipeline_mode = #tpu.pipeline_mode<synchronous>, transform_indices = @transform_5, window_bounds = array<i64: 1, 4>}, {transform_indices = @transform_6, window_bounds = array<i64: 2, 4>}]} {
    %c0 = arith.constant 0 : index
    %c0_0 = arith.constant 0 : index
    %c0_1 = arith.constant 0 : index
    %0 = vector.load %arg1[%c0, %c0_0, %c0_1] : memref<2x20x32xf32, #tpu.memory_space<vmem>>, vector<2x20x32xf32>
    %1 = vector.extract_strided_slice %0 {offsets = [0, 0, 0], sizes = [2, 16, 32], strides = [1, 1, 1]} : vector<2x20x32xf32> to vector<2x16x32xf32>
    %2 = vector.extract_strided_slice %0 {offsets = [0, 1, 0], sizes = [2, 16, 32], strides = [1, 1, 1]} : vector<2x20x32xf32> to vector<2x16x32xf32>
    %3 = vector.extract_strided_slice %0 {offsets = [0, 2, 0], sizes = [2, 16, 32], strides = [1, 1, 1]} : vector<2x20x32xf32> to vector<2x16x32xf32>
    %4 = vector.extract_strided_slice %0 {offsets = [0, 3, 0], sizes = [2, 16, 32], strides = [1, 1, 1]} : vector<2x20x32xf32> to vector<2x16x32xf32>
    %5 = vector.extract_strided_slice %0 {offsets = [0, 4, 0], sizes = [2, 16, 32], strides = [1, 1, 1]} : vector<2x20x32xf32> to vector<2x16x32xf32>
    %6 = tpu.concatenate %1, %2, %3, %4, %5 in 2 : vector<2x16x32xf32>, vector<2x16x32xf32>, vector<2x16x32xf32>, vector<2x16x32xf32>, vector<2x16x32xf32> -> vector<2x16x160xf32>
    %7 = vector.shape_cast %6 : vector<2x16x160xf32> to vector<32x160xf32>
    %c0_2 = arith.constant 0 : index
    %c0_3 = arith.constant 0 : index
    %8 = vector.load %arg2[%c0_2, %c0_3] : memref<160x24xf32, #tpu.memory_space<vmem>>, vector<160x24xf32>
    %cst = arith.constant dense<0.000000e+00> : vector<32x24xf32>
    %9 = tpu.matmul %7, %8, %cst {dimension_numbers = #tpu.dot_dimension_numbers<[1], [0], [0], [1], [0, 0, 1, 1], [], []>} : vector<32x160xf32>, vector<160x24xf32>, vector<32x24xf32> -> vector<32x24xf32>
    %10 = vector.shape_cast %9 : vector<32x24xf32> to vector<2x16x24xf32>
    %c0_4 = arith.constant 0 : index
    %c0_5 = arith.constant 0 : index
    %11 = vector.load %arg3[%c0_4, %c0_5] : memref<1x24xf32, #tpu.memory_space<vmem>>, vector<1x24xf32>
    %12 = vector.shape_cast %11 : vector<1x24xf32> to vector<1x1x24xf32>
    %13 = vector.broadcast %12 : vector<1x1x24xf32> to vector<2x16x24xf32>
    %14 = arith.addf %10, %13 : vector<2x16x24xf32>
    %cst_6 = arith.constant 0.000000e+00 : f32
    %15 = vector.broadcast %cst_6 : f32 to vector<2x16x24xf32>
    %16 = arith.maximumf %14, %15 : vector<2x16x24xf32>
    %c0_7 = arith.constant 0 : index
    %c0_8 = arith.constant 0 : index
    %17 = vector.load %arg4[%c0_7, %c0_8] : memref<16x24xf32, #tpu.memory_space<vmem>>, vector<16x24xf32>
    %18 = vector.shape_cast %17 : vector<16x24xf32> to vector<1x16x24xf32>
    %19 = vector.broadcast %18 : vector<1x16x24xf32> to vector<2x16x24xf32>
    %20 = arith.mulf %16, %19 : vector<2x16x24xf32>
    %cst_9 = arith.constant dense<0xFF800000> : vector<2x24xf32>
    %21 = vector.multi_reduction <maximumf>, %20, %cst_9 [1] : vector<2x16x24xf32> to vector<2x24xf32>
    %c0_10 = arith.constant 0 : index
    %c0_11 = arith.constant 0 : index
    %22 = vector.load %arg5[%c0_10, %c0_11] : memref<24x4xf32, #tpu.memory_space<vmem>>, vector<24x4xf32>
    %cst_12 = arith.constant dense<0.000000e+00> : vector<2x4xf32>
    %23 = tpu.matmul %21, %22, %cst_12 {dimension_numbers = #tpu.dot_dimension_numbers<[1], [0], [0], [1], [0, 0, 1, 1], [], []>} : vector<2x24xf32>, vector<24x4xf32>, vector<2x4xf32> -> vector<2x4xf32>
    %c0_13 = arith.constant 0 : index
    %c0_14 = arith.constant 0 : index
    %24 = vector.load %arg6[%c0_13, %c0_14] : memref<1x4xf32, #tpu.memory_space<vmem>>, vector<1x4xf32>
    %25 = vector.broadcast %24 : vector<1x4xf32> to vector<2x4xf32>
    %26 = arith.addf %23, %25 : vector<2x4xf32>
    %27 = arith.negf %26 : vector<2x4xf32>
    %28 = math.exp %27 : vector<2x4xf32>
    %cst_15 = arith.constant 1.000000e+00 : f32
    %29 = vector.broadcast %cst_15 : f32 to vector<2x4xf32>
    %30 = arith.addf %29, %28 : vector<2x4xf32>
    %31 = arith.divf %29, %30 : vector<2x4xf32>
    %c0_16 = arith.constant 0 : index
    %c0_17 = arith.constant 0 : index
    %32 = vector.load %arg7[%c0_16, %c0_17] : memref<2x4xf32, #tpu.memory_space<vmem>>, vector<2x4xf32>
    tpu.vector_store %arg7[%c0_16, %c0_17], %31 {strides = array<i32>} : memref<2x4xf32, #tpu.memory_space<vmem>>, vector<2x4xf32>,
    return
  }
  func.func @transform_0(%arg0: i32) -> (i32, i32, i32) {
    %c0_i32 = arith.constant 0 : i32
    %c0_i32_0 = arith.constant 0 : i32
    %c0_i32_1 = arith.constant 0 : i32
    return %arg0, %c0_i32, %c0_i32_0 : i32, i32, i32
  }
  func.func @transform_1(%arg0: i32) -> (i32, i32) {
    %c0_i32 = arith.constant 0 : i32
    %c0_i32_0 = arith.constant 0 : i32
    %c0_i32_1 = arith.constant 0 : i32
    return %c0_i32, %c0_i32_0 : i32, i32
  }
  func.func @transform_2(%arg0: i32) -> (i32, i32) {
    %c0_i32 = arith.constant 0 : i32
    %c0_i32_0 = arith.constant 0 : i32
    %c0_i32_1 = arith.constant 0 : i32
    return %c0_i32, %c0_i32_0 : i32, i32
  }
  func.func @transform_3(%arg0: i32) -> (i32, i32) {
    %c0_i32 = arith.constant 0 : i32
    %c0_i32_0 = arith.constant 0 : i32
    %c0_i32_1 = arith.constant 0 : i32
    return %c0_i32, %c0_i32_0 : i32, i32
  }
  func.func @transform_4(%arg0: i32) -> (i32, i32) {
    %c0_i32 = arith.constant 0 : i32
    %c0_i32_0 = arith.constant 0 : i32
    %c0_i32_1 = arith.constant 0 : i32
    return %c0_i32, %c0_i32_0 : i32, i32
  }
  func.func @transform_5(%arg0: i32) -> (i32, i32) {
    %c0_i32 = arith.constant 0 : i32
    %c0_i32_0 = arith.constant 0 : i32
    %c0_i32_1 = arith.constant 0 : i32
    return %c0_i32, %c0_i32_0 : i32, i32
  }
  func.func @transform_6(%arg0: i32) -> (i32, i32) {
    %c0_i32 = arith.constant 0 : i32
    %c0_i32_0 = arith.constant 0 : i32
    return %arg0, %c0_i32 : i32, i32
  }
}

</mosaic_0001>

<llo_original>
// kernel: tpu_custom_call.1
$region0: #{tpu_custom_call.1}
  #allocation0 [shape = 'u32[]', space=smem, size = 0x4, offset = 0x4, fixed_abs, tag = 'smem constant byte address 0x4 - core index']
  #allocation1 [shape = 'u32[144,128]{1,0:T(1,128)}', space=vmem, size = 0x12000, scoped, tag = 'internal scratch']
  %s0 = inlined_call_operand.hbm [shape: f32[2,20,32], index: 0, kind: input, shape index: {}]
  %s1 = inlined_call_operand.hbm [shape: f32[160,24], index: 1, kind: input, shape index: {}]
  %s2 = inlined_call_operand.hbm [shape: f32[1,24], index: 2, kind: input, shape index: {}]
  %s3 = inlined_call_operand.hbm [shape: f32[16,24], index: 3, kind: input, shape index: {}]
  %s4 = inlined_call_operand.hbm [shape: f32[24,4], index: 4, kind: input, shape index: {}]
  %s5 = inlined_call_operand.hbm [shape: f32[1,4], index: 5, kind: input, shape index: {}]
  %s6 = inlined_call_operand.hbm [shape: f32[2,4], index: 6, kind: output, shape index: {}]
  %s7 = sld [smem:[#allocation0]]
  $region58: #{tpu_custom_call.1} parent=0
    _
  %s9 = ssub.s32 1, %s7
  %s10 = scalar_select 0, %s9, %s7
  $region1: #{tpu_custom_call.1} parent=0
    #allocation2 [shape = 'u8[24576]{0}', space=vmem, size = 0x6000, scoped, tag = 'input window, operand 0, single buffered']
    #allocation3 [shape = 's32[1]{0}', space=sflag, size = 0x4, scoped, tag = 'scoped memory for tpu_custom_call.1']
    #allocation4 [shape = 's32[1]{0}', space=sflag, size = 0x4, scoped, tag = 'scoped memory for tpu_custom_call.1']
    #allocation5 [shape = 'u8[81920]{0}', space=vmem, size = 0x14000, scoped, tag = 'input window, operand 1, single buffered']
    #allocation6 [shape = 's32[1]{0}', space=sflag, size = 0x4, scoped, tag = 'scoped memory for tpu_custom_call.1']
    #allocation7 [shape = 'u8[512]{0}', space=vmem, size = 0x400, scoped, tag = 'input window, operand 2, single buffered']
    #allocation8 [shape = 'u8[8192]{0}', space=vmem, size = 0x2000, scoped, tag = 'input window, operand 3, single buffered']
    #allocation9 [shape = 's32[1]{0}', space=sflag, size = 0x4, scoped, tag = 'scoped memory for tpu_custom_call.1']
    #allocation10 [shape = 'u8[12288]{0}', space=vmem, size = 0x3000, scoped, tag = 'input window, operand 4, single buffered']
    #allocation11 [shape = 'u8[512]{0}', space=vmem, size = 0x400, scoped, tag = 'input window, operand 5, single buffered']
    #allocation12 [shape = 's32[1]{0}', space=sflag, size = 0x4, scoped, tag = 'scoped memory for tpu_custom_call.1']
    #allocation13 [shape = 'u8[1024]{0}', space=vmem, size = 0x400, scoped, tag = 'output window, operand 0, single buffered']
    %11 = vsyncpa [#allocation3], 0
    %12 = vsyncpa [#allocation6], 0
    %13 = vsyncpa [#allocation9], 0
    %14 = vsyncpa [#allocation12], 0
    %15 = vsyncpa [#allocation4], 0
    // Predicated region
    $region2: #{tpu_custom_call.1} parent=1 // pred_check
      _
    $region3: #{tpu_custom_call.1} parent=1 // pred_check_branch
      %17 = sbr.rel (0) target = $region5
    $region4: #{tpu_custom_call.1} parent=1 // pred_region
      %s19 = ssub.s32 768, 768
      %20 = vsyncadd [#allocation3], %s19
      %s21 = sshll.u32 [#allocation2], 4
      %s22 = int_to_ptr.vmem [resolvable:$true] %s21
      %27 = dma.hbm_to_vmem [thread:$0]  %s0, 768, %s22, [#allocation3], 128, 128, 8
    $region5: #{tpu_custom_call.1} parent=1 // pred_fallthru
      _
    // Predicated region
    $region6: #{tpu_custom_call.1} parent=1 // pred_check
      _
    $region7: #{tpu_custom_call.1} parent=1 // pred_check_branch
      %29 = sbr.rel (0) target = $region9
    $region8: #{tpu_custom_call.1} parent=1 // pred_region
      %s31 = ssub.s32 2560, 2560
      %32 = vsyncadd [#allocation6], %s31
      %s33 = sshll.u32 [#allocation5], 4
      %s34 = int_to_ptr.vmem [resolvable:$true] %s33
      %39 = dma.hbm_to_vmem [thread:$0]  %s1, 2560, %s34, [#allocation6], 128, 128, 8
    $region9: #{tpu_custom_call.1} parent=1 // pred_fallthru
      _
    // Predicated region
    $region10: #{tpu_custom_call.1} parent=1 // pred_check
      _
    $region11: #{tpu_custom_call.1} parent=1 // pred_check_branch
      %41 = sbr.rel (0) target = $region13
    $region12: #{tpu_custom_call.1} parent=1 // pred_region
      %s43 = ssub.s32 16, 16
      %44 = vsyncadd [#allocation6], %s43
      %s46 = sshll.u32 [#allocation7], 4
      %s47 = int_to_ptr.vmem [resolvable:$true] %s46
      %49 = dma.hbm_to_vmem [thread:$0]  %s2, 16, %s47, [#allocation6]
    $region13: #{tpu_custom_call.1} parent=1 // pred_fallthru
      _
    // Predicated region
    $region14: #{tpu_custom_call.1} parent=1 // pred_check
      _
    $region15: #{tpu_custom_call.1} parent=1 // pred_check_branch
      %51 = sbr.rel (0) target = $region17
    $region16: #{tpu_custom_call.1} parent=1 // pred_region
      %s53 = ssub.s32 256, 256
      %54 = vsyncadd [#allocation9], %s53
      %s55 = sshll.u32 [#allocation8], 4
      %s56 = int_to_ptr.vmem [resolvable:$true] %s55
      %61 = dma.hbm_to_vmem [thread:$0]  %s3, 256, %s56, [#allocation9], 128, 128, 8
    $region17: #{tpu_custom_call.1} parent=1 // pred_fallthru
      _
    // Predicated region
    $region18: #{tpu_custom_call.1} parent=1 // pred_check
      _
    $region19: #{tpu_custom_call.1} parent=1 // pred_check_branch
      %63 = sbr.rel (0) target = $region21
    $region20: #{tpu_custom_call.1} parent=1 // pred_region
      %s65 = ssub.s32 384, 384
      %66 = vsyncadd [#allocation9], %s65
      %s67 = sshll.u32 [#allocation10], 4
      %s68 = int_to_ptr.vmem [resolvable:$true] %s67
      %73 = dma.hbm_to_vmem [thread:$0]  %s4, 384, %s68, [#allocation9], 128, 128, 8
    $region21: #{tpu_custom_call.1} parent=1 // pred_fallthru
      _
    // Predicated region
    $region22: #{tpu_custom_call.1} parent=1 // pred_check
      _
    $region23: #{tpu_custom_call.1} parent=1 // pred_check_branch
      %75 = sbr.rel (0) target = $region25
    $region24: #{tpu_custom_call.1} parent=1 // pred_region
      %s77 = ssub.s32 16, 16
      %78 = vsyncadd [#allocation12], %s77
      %s80 = sshll.u32 [#allocation11], 4
      %s81 = int_to_ptr.vmem [resolvable:$true] %s80
      %83 = dma.hbm_to_vmem [thread:$0]  %s5, 16, %s81, [#allocation12]
    $region25: #{tpu_custom_call.1} parent=1 // pred_fallthru
      _
    // Predicated region
    $region26: #{tpu_custom_call.1} parent=1 // pred_check
      _
    $region27: #{tpu_custom_call.1} parent=1 // pred_check_branch
      %85 = sbr.rel (0) target = $region29
    $region28: #{tpu_custom_call.1} parent=1 // pred_region
      %86 = dma.done [#allocation3], 768
    $region29: #{tpu_custom_call.1} parent=1 // pred_fallthru
      _
    // Predicated region
    $region30: #{tpu_custom_call.1} parent=1 // pred_check
      _
    $region31: #{tpu_custom_call.1} parent=1 // pred_check_branch
      %88 = sbr.rel (0) target = $region33
    $region32: #{tpu_custom_call.1} parent=1 // pred_region
      %89 = dma.done [#allocation6], 2560
    $region33: #{tpu_custom_call.1} parent=1 // pred_fallthru
      _
    // Predicated region
    $region34: #{tpu_custom_call.1} parent=1 // pred_check
      _
    $region35: #{tpu_custom_call.1} parent=1 // pred_check_branch
      %91 = sbr.rel (0) target = $region37
    $region36: #{tpu_custom_call.1} parent=1 // pred_region
      %92 = dma.done [#allocation6], 16
    $region37: #{tpu_custom_call.1} parent=1 // pred_fallthru
      _
    // Predicated region
    $region38: #{tpu_custom_call.1} parent=1 // pred_check
      _
    $region39: #{tpu_custom_call.1} parent=1 // pred_check_branch
      %94 = sbr.rel (0) target = $region41
    $region40: #{tpu_custom_call.1} parent=1 // pred_region
      %95 = dma.done [#allocation9], 256
    $region41: #{tpu_custom_call.1} parent=1 // pred_fallthru
      _
    // Predicated region
    $region42: #{tpu_custom_call.1} parent=1 // pred_check
      _
    $region43: #{tpu_custom_call.1} parent=1 // pred_check_branch
      %97 = sbr.rel (0) target = $region45
    $region44: #{tpu_custom_call.1} parent=1 // pred_region
      %98 = dma.done [#allocation9], 384
    $region45: #{tpu_custom_call.1} parent=1 // pred_fallthru
      _
    // Predicated region
    $region46: #{tpu_custom_call.1} parent=1 // pred_check
      _
    $region47: #{tpu_custom_call.1} parent=1 // pred_check_branch
      %100 = sbr.rel (0) target = $region49
    $region48: #{tpu_custom_call.1} parent=1 // pred_region
      %101 = dma.done [#allocation12], 16
    $region49: #{tpu_custom_call.1} parent=1 // pred_fallthru
      _
    %v102 = vld [vmem:[#allocation2] sm:$0xff]
    %v103 = vld [vmem:[#allocation2 + $0x8] sm:$0xff]
    %v104 = vld [vmem:[#allocation2 + $0x10] sm:$0xf]
    %v105 = vld [vmem:[#allocation2 + $0x18] sm:$0xff]
    %v106 = vld [vmem:[#allocation2 + $0x20] sm:$0xff]
    %v107 = vld [vmem:[#allocation2 + $0x28] sm:$0xf]
    %vm114 = vcmask 1046528
    %v115 = vrot.slane %v102, 1
    %v116 = vrot.slane %v103, 1
    %v117 = vsel %vm114, %v115, %v116
    %v118 = vrot.slane %v104, 1
    %v119 = vsel %vm114, %v116, %v118
    %v120 = vrot.slane %v105, 1
    %v121 = vrot.slane %v106, 1
    %v122 = vsel %vm114, %v120, %v121
    %v123 = vrot.slane %v107, 1
    %v124 = vsel %vm114, %v121, %v123
    %125 = vrot.lane.b32.xlu0 %v117, 32
    %v126 = vpop.permute.xlu0 %125
    %127 = vrot.lane.b32.xlu0 %v119, 32
    %v128 = vpop.permute.xlu0 %127
    %129 = vrot.lane.b32.xlu0 %v122, 32
    %v130 = vpop.permute.xlu0 %129
    %131 = vrot.lane.b32.xlu0 %v124, 32
    %v132 = vpop.permute.xlu0 %131
    %vm137 = vcmask 1045504
    %v138 = vrot.slane %v102, 2
    %v139 = vrot.slane %v103, 2
    %v140 = vsel %vm137, %v138, %v139
    %v141 = vrot.slane %v104, 2
    %v142 = vsel %vm137, %v139, %v141
    %v143 = vrot.slane %v105, 2
    %v144 = vrot.slane %v106, 2
    %v145 = vsel %vm137, %v143, %v144
    %v146 = vrot.slane %v107, 2
    %v147 = vsel %vm137, %v144, %v146
    %148 = vrot.lane.b32.xlu0 %v140, 64
    %v149 = vpop.permute.xlu0 %148
    %150 = vrot.lane.b32.xlu0 %v142, 64
    %v151 = vpop.permute.xlu0 %150
    %152 = vrot.lane.b32.xlu0 %v145, 64
    %v153 = vpop.permute.xlu0 %152
    %154 = vrot.lane.b32.xlu0 %v147, 64
    %v155 = vpop.permute.xlu0 %154
    %vm160 = vcmask 1044480
    %v161 = vrot.slane %v102, 3
    %v162 = vrot.slane %v103, 3
    %v163 = vsel %vm160, %v161, %v162
    %v164 = vrot.slane %v104, 3
    %v165 = vsel %vm160, %v162, %v164
    %v166 = vrot.slane %v105, 3
    %v167 = vrot.slane %v106, 3
    %v168 = vsel %vm160, %v166, %v167
    %v169 = vrot.slane %v107, 3
    %v170 = vsel %vm160, %v167, %v169
    %171 = vrot.lane.b32.xlu0 %v163, 96
    %v172 = vpop.permute.xlu0 %171
    %173 = vrot.lane.b32.xlu0 %v165, 96
    %v174 = vpop.permute.xlu0 %173
    %175 = vrot.lane.b32.xlu0 %v168, 96
    %v176 = vpop.permute.xlu0 %175
    %177 = vrot.lane.b32.xlu0 %v170, 96
    %v178 = vpop.permute.xlu0 %177
    %vm183 = vcmask 1043456
    %v184 = vrot.slane %v102, 4
    %v185 = vrot.slane %v103, 4
    %v186 = vsel %vm183, %v184, %v185
    %v187 = vrot.slane %v104, 4
    %v188 = vsel %vm183, %v185, %v187
    %v189 = vrot.slane %v105, 4
    %v190 = vrot.slane %v106, 4
    %v191 = vsel %vm183, %v189, %v190
    %v192 = vrot.slane %v107, 4
    %v193 = vsel %vm183, %v190, %v192
    %vm194 = vcmask 261120
    %v195 = vsel %vm194, %v102, %v126
    %v196 = vsel %vm194, %v103, %v128
    %v197 = vsel %vm194, %v105, %v130
    %v198 = vsel %vm194, %v106, %v132
    %vm199 = vcmask 523264
    %v200 = vsel %vm199, %v195, %v149
    %v201 = vsel %vm199, %v196, %v151
    %v202 = vsel %vm199, %v197, %v153
    %v203 = vsel %vm199, %v198, %v155
    %vm204 = vcmask 785408
    %v205 = vsel %vm204, %v200, %v172
    %v206 = vsel %vm204, %v201, %v174
    %v207 = vsel %vm204, %v202, %v176
    %v208 = vsel %vm204, %v203, %v178
    %v209 = vld [vmem:[#allocation5] sm:$0xff]
    %v210 = vld [vmem:[#allocation5 + $0x8] sm:$0xff]
    %v211 = vld [vmem:[#allocation5 + $0x10] sm:$0xff]
    %v212 = vld [vmem:[#allocation5 + $0x18] sm:$0xff]
    %v213 = vld [vmem:[#allocation5 + $0x20] sm:$0xff]
    %v214 = vld [vmem:[#allocation5 + $0x28] sm:$0xff]
    %v215 = vld [vmem:[#allocation5 + $0x30] sm:$0xff]
    %v216 = vld [vmem:[#allocation5 + $0x38] sm:$0xff]
    %v217 = vld [vmem:[#allocation5 + $0x40] sm:$0xff]
    %v218 = vld [vmem:[#allocation5 + $0x48] sm:$0xff]
    %v219 = vld [vmem:[#allocation5 + $0x50] sm:$0xff]
    %v220 = vld [vmem:[#allocation5 + $0x58] sm:$0xff]
    %v221 = vld [vmem:[#allocation5 + $0x60] sm:$0xff]
    %v222 = vld [vmem:[#allocation5 + $0x68] sm:$0xff]
    %v223 = vld [vmem:[#allocation5 + $0x70] sm:$0xff]
    %v224 = vld [vmem:[#allocation5 + $0x78] sm:$0xff]
    %v225 = vld [vmem:[#allocation5 + $0x80] sm:$0xff]
    %v226 = vld [vmem:[#allocation5 + $0x88] sm:$0xff]
    %v227 = vld [vmem:[#allocation5 + $0x90] sm:$0xff]
    %v228 = vld [vmem:[#allocation5 + $0x98] sm:$0xff]
    %v229 = vsel %vm194, %v186, 0
    %v231 = vsel %vm194, %v188, 0
    %v233 = vsel %vm194, %v191, 0
    %v235 = vsel %vm194, %v193, 0
    %237 = vmatprep.subr.mxu0 0.0
    %238 = vmatpush1.msra.mxu0 %v209
    %239 = vmatprep.subr.mxu0 0.0
    %240 = vmatpush1.msra.mxu0 %v210
    %241 = vmatprep.subr.mxu0 0.0
    %242 = vmatpush1.msra.mxu0 %v211
    %243 = vmatprep.subr.mxu0 0.0
    %244 = vmatpush1.msra.mxu0 %v212
    %245 = vmatprep.subr.mxu0 0.0
    %246 = vmatpush1.msra.mxu0 %v213
    %247 = vmatprep.subr.mxu0 0.0
    %248 = vmatpush1.msra.mxu0 %v214
    %249 = vmatprep.subr.mxu0 0.0
    %250 = vmatpush1.msra.mxu0 %v215
    %251 = vmatprep.subr.mxu0 0.0
    %252 = vmatpush1.msra.mxu0 %v216
    %253 = vmatprep.subr.mxu0 0.0
    %254 = vmatpush1.msra.mxu0 %v217
    %255 = vmatprep.subr.mxu0 0.0
    %256 = vmatpush1.msra.mxu0 %v218
    %257 = vmatprep.subr.mxu0 0.0
    %258 = vmatpush1.msra.mxu0 %v219
    %259 = vmatprep.subr.mxu0 0.0
    %260 = vmatpush1.msra.mxu0 %v220
    %261 = vmatprep.subr.mxu0 0.0
    %262 = vmatpush1.msra.mxu0 %v221
    %263 = vmatprep.subr.mxu0 0.0
    %264 = vmatpush1.msra.mxu0 %v222
    %265 = vmatprep.subr.mxu0 0.0
    %266 = vmatpush1.msra.mxu0 %v223
    %267 = vmatprep.subr.mxu0 0.0
    %268 = vmatpush1.msra.mxu0 %v224
    %269 = vmatprep.subr.mxu0 0.0
    %270 = vmatpush1.msra.mxu0 %v225
    %271 = vmatprep.subr.mxu0 0.0
    %272 = vmatpush1.msra.mxu0 %v226
    %273 = vmatprep.subr.mxu0 0.0
    %274 = vmatpush1.msra.mxu0 %v227
    %275 = vmatprep.subr.mxu0 0.0
    %276 = vmatpush1.msra.mxu0 %v228
    %277 = vmatprep.subr.mxu0 0.0
    %278 = vmatpush1.msra.mxu0 0.0
    %279 = vmatprep.subr.mxu0 0.0
    %280 = vmatpush1.msra.mxu0 0.0
    %281 = vmatprep.subr.mxu0 0.0
    %282 = vmatpush1.msra.mxu0 0.0
    %283 = vmatprep.subr.mxu0 0.0
    %284 = vmatpush1.msra.mxu0 0.0
    %285 = vmatprep.subr.mxu0 0.0
    %286 = vmatpush1.msra.mxu0 0.0
    %287 = vmatprep.subr.mxu0 0.0
    %288 = vmatpush1.msra.mxu0 0.0
    %289 = vmatprep.subr.mxu0 0.0
    %290 = vmatpush1.msra.mxu0 0.0
    %291 = vmatprep.subr.mxu0 0.0
    %292 = vmatpush1.msra.mxu0 0.0
    %293 = vmatprep.subr.mxu0 0.0
    %294 = vmatpush1.msra.mxu0 0.0
    %295 = vmatprep.subr.mxu0 0.0
    %296 = vmatpush1.msra.mxu0 0.0
    %297 = vmatprep.subr.mxu0 0.0
    %298 = vmatpush1.msra.mxu0 0.0
    %299 = vmatprep.subr.mxu0 0.0
    %300 = vmatpush1.msra.mxu0 0.0
    %301 = vmatprep.mubr.f32.mxu0 %v229
    %302 = vmatmul.mubr.f32.gmra.mrb[0].mxu0 %v205
    %v303 = vpop.f32.mrb[0].mxu0
    %v304 = vadd.f32 0.0, %v303
    %v305 = vpop.f32.mrb[0].mxu0
    %306 = vmatprep.mubr.f32.mxu0 %v231
    %307 = vmatmul.mubr.f32.gmra.mrb[0].mxu0 %v206
    %v308 = vpop.f32.mrb[0].mxu0
    %v309 = vadd.f32 0.0, %v308
    %v310 = vpop.f32.mrb[0].mxu0
    %311 = vmatprep.mubr.f32.mxu0 %v233
    %312 = vmatmul.mubr.f32.gmra.mrb[0].mxu0 %v207
    %v313 = vpop.f32.mrb[0].mxu0
    %v314 = vadd.f32 0.0, %v313
    %v315 = vpop.f32.mrb[0].mxu0
    %316 = vmatprep.mubr.f32.mxu0 %v235
    %317 = vmatmul.mubr.f32.gmra.mrb[0].mxu0 %v208
    %v318 = vpop.f32.mrb[0].mxu0
    %v319 = vadd.f32 0.0, %v318
    %v320 = vpop.f32.mrb[0].mxu0
    %321 = vdwg.mxu0
    %v322 = vld [vmem:[#allocation7] sm:$0x1]
    %v324 = vlaneseq
    %v325 = vshrl.u32 %v324, 7
    %v326 = vsub.s32 0, %v325
    %v327 = vrot.slane %v322, %v326
    %v329 = vadd.f32 %v304, %v327
    %v330 = vadd.f32 %v309, %v327
    %v331 = vadd.f32 %v314, %v327
    %v332 = vadd.f32 %v319, %v327
    %v333 = vmax.f32 %v329, 0.0
    %v334 = vmax.f32 %v330, 0.0
    %v335 = vmax.f32 %v331, 0.0
    %v336 = vmax.f32 %v332, 0.0
    %v337 = vld [vmem:[#allocation8] sm:$0xff]
    %v338 = vld [vmem:[#allocation8 + $0x8] sm:$0xff]
    %v339 = vmul.f32 %v333, %v337
    %v340 = vmul.f32 %v334, %v338
    %v341 = vmul.f32 %v335, %v337
    %v342 = vmul.f32 %v336, %v338
    %vm343 = vcmask 195584
    %v344 = vsel %vm343, %v339, -inf
    %v345 = vsel %vm343, %v340, -inf
    %v346 = vmax.f32 %v344, %v345
    %v347 = vrot.slane %v346, 4
    %v348 = vmax.f32 %v346, %v347
    %v349 = vrot.slane %v348, 2
    %v350 = vmax.f32 %v348, %v349
    %v351 = vrot.slane %v350, 1
    %v352 = vmax.f32 %v350, %v351
    %v353 = vsel %vm343, %v341, -inf
    %v354 = vsel %vm343, %v342, -inf
    %v355 = vmax.f32 %v353, %v354
    %v356 = vrot.slane %v355, 4
    %v357 = vmax.f32 %v355, %v356
    %v358 = vrot.slane %v357, 2
    %v359 = vmax.f32 %v357, %v358
    %v360 = vrot.slane %v359, 1
    %v361 = vmax.f32 %v359, %v360
    %v362 = vld [vmem:[#allocation10] sm:$0xff]
    %v363 = vld [vmem:[#allocation10 + $0x8] sm:$0xff]
    %v364 = vld [vmem:[#allocation10 + $0x10] sm:$0xff]
    %v365 = vld [vmem:[#allocation11] sm:$0x1]
    %v367 = vlaneseq
    %v368 = vshrl.u32 %v367, 7
    %v369 = vsub.s32 0, %v368
    %v370 = vrot.slane %v365, %v369
    %vm374 = vcmask 1041409
    %v375 = vsel %vm374, %v361, %v352
    %v376 = vsel %vm343, %v375, 0
    %378 = vmatprep.subr.mxu0 0.0
    %379 = vmatpush1.msra.mxu0 %v362
    %380 = vmatprep.subr.mxu0 0.0
    %381 = vmatpush1.msra.mxu0 %v363
    %382 = vmatprep.subr.mxu0 0.0
    %383 = vmatpush1.msra.mxu0 %v364
    %384 = vmatprep.subr.mxu0 0.0
    %385 = vmatpush1.msra.mxu0 0.0
    %386 = vmatprep.subr.mxu0 0.0
    %387 = vmatpush1.msra.mxu0 0.0
    %388 = vmatprep.subr.mxu0 0.0
    %389 = vmatpush1.msra.mxu0 0.0
    %390 = vmatprep.subr.mxu0 0.0
    %391 = vmatpush1.msra.mxu0 0.0
    %392 = vmatprep.subr.mxu0 0.0
    %393 = vmatpush1.msra.mxu0 0.0
    %394 = vmatprep.subr.mxu0 0.0
    %395 = vmatpush1.msra.mxu0 0.0
    %396 = vmatprep.subr.mxu0 0.0
    %397 = vmatpush1.msra.mxu0 0.0
    %398 = vmatprep.subr.mxu0 0.0
    %399 = vmatpush1.msra.mxu0 0.0
    %400 = vmatprep.subr.mxu0 0.0
    %401 = vmatpush1.msra.mxu0 0.0
    %402 = vmatprep.subr.mxu0 0.0
    %403 = vmatpush1.msra.mxu0 0.0
    %404 = vmatprep.subr.mxu0 0.0
    %405 = vmatpush1.msra.mxu0 0.0
    %406 = vmatprep.subr.mxu0 0.0
    %407 = vmatpush1.msra.mxu0 0.0
    %408 = vmatprep.subr.mxu0 0.0
    %409 = vmatpush1.msra.mxu0 0.0
    %410 = vmatprep.subr.mxu0 0.0
    %411 = vmatpush1.msra.mxu0 0.0
    %412 = vmatprep.subr.mxu0 0.0
    %413 = vmatpush1.msra.mxu0 0.0
    %414 = vmatprep.subr.mxu0 0.0
    %415 = vmatpush1.msra.mxu0 0.0
    %416 = vmatprep.subr.mxu0 0.0
    %417 = vmatpush1.msra.mxu0 0.0
    %418 = vmatprep.subr.mxu0 0.0
    %419 = vmatpush1.msra.mxu0 0.0
    %420 = vmatprep.subr.mxu0 0.0
    %421 = vmatpush1.msra.mxu0 0.0
    %422 = vmatprep.subr.mxu0 0.0
    %423 = vmatpush1.msra.mxu0 0.0
    %424 = vmatprep.subr.mxu0 0.0
    %425 = vmatpush1.msra.mxu0 0.0
    %426 = vmatprep.subr.mxu0 0.0
    %427 = vmatpush1.msra.mxu0 0.0
    %428 = vmatprep.subr.mxu0 0.0
    %429 = vmatpush1.msra.mxu0 0.0
    %430 = vmatprep.subr.mxu0 0.0
    %431 = vmatpush1.msra.mxu0 0.0
    %432 = vmatprep.subr.mxu0 0.0
    %433 = vmatpush1.msra.mxu0 0.0
    %434 = vmatprep.subr.mxu0 0.0
    %435 = vmatpush1.msra.mxu0 0.0
    %436 = vmatprep.subr.mxu0 0.0
    %437 = vmatpush1.msra.mxu0 0.0
    %438 = vmatprep.subr.mxu0 0.0
    %439 = vmatpush1.msra.mxu0 0.0
    %440 = vmatprep.subr.mxu0 0.0
    %441 = vmatpush1.msra.mxu0 0.0
    %442 = vmatprep.mubr.f32.mxu0 0.0
    %443 = vmatmul.mubr.f32.gmra.mrb[0].mxu0 %v376
    %v444 = vpop.f32.mrb[0].mxu0
    %v445 = vadd.f32 %v370, %v444
    %v446 = vpop.f32.mrb[0].mxu0
    %447 = vdwg.mxu0
    %v448 = vxor.u32 %v445, 2147483648
    %v449 = vmul.f32 %v448, 1.442695
    %v450 = vpow.pop %v449
    %v451 = vadd.f32 %v450, 1.0
    %v452 = vrcp.pop %v451
    %v453 = vmul.f32 1.0, %v452
    %vm454 = vcmask 25600
    %455 = vst.msk [vmem:[#allocation13] sm:$0x3] %vm454, %v453
    // Predicated region
    $region50: #{tpu_custom_call.1} parent=1 // pred_check
      _
    $region51: #{tpu_custom_call.1} parent=1 // pred_check_branch
      %457 = sbr.rel (0) target = $region53
    $region52: #{tpu_custom_call.1} parent=1 // pred_region
      %s459 = ssub.s32 32, 32
      %460 = vsyncadd [#allocation4], %s459
      %s462 = sshll.u32 [#allocation13], 4
      %s463 = int_to_ptr.vmem [resolvable:$true] %s462
      %465 = dma.vmem_to_hbm [thread:$0]  %s463, 32, %s6, [#allocation4]
    $region53: #{tpu_custom_call.1} parent=1 // pred_fallthru
      _
    // Predicated region
    $region54: #{tpu_custom_call.1} parent=1 // pred_check
      _
    $region55: #{tpu_custom_call.1} parent=1 // pred_check_branch
      %467 = sbr.rel (0) target = $region57
    $region56: #{tpu_custom_call.1} parent=1 // pred_region
      %468 = dma.done [#allocation4], 32
    $region57: #{tpu_custom_call.1} parent=1 // pred_fallthru
      _
    %469 = vsyncpa [#allocation3], 1
    %470 = vsyncpa [#allocation6], 1
    %471 = vsyncpa [#allocation9], 1
    %472 = vsyncpa [#allocation12], 1
    %473 = vsyncpa [#allocation4], 1

</llo_original>
